<compile_context>
chip_gen: v6e
topology: v6e:2x2x1
jax: 0.10.0
libtpu: 0.0.40
codegen_flags: <defaults>
</compile_context>

<pallas_src>
import jax
import jax.numpy as jnp
from jax import lax
from jax.experimental import pallas as pl
from jax.experimental.pallas import tpu as pltpu

FP_DIM = 2048
HIDDEN = 100


def _ligand2d_kernel(x_ref, w1_ref, b1_ref, w2_ref, b2_ref, out_ref):
    # First layer on the MXU: bf16 x bf16 with f32 accumulation.
    # fps are binary, so the bf16 cast is exact.
    x = x_ref[...].astype(jnp.bfloat16)                         # [B, 2048]
    h = lax.dot_general(
        x, w1_ref[...],                                          # w1: [100, 2048]
        dimension_numbers=(((1,), (1,)), ((), ())),              # x @ w1.T
        preferred_element_type=jnp.float32)                      # [B, 100] f32
    h = jnp.maximum(h + b1_ref[...], 0.0)                        # [B, 100]

    # Output layer (N=1): VPU multiply + lane reduce instead of an MXU pass.
    logits = jnp.sum(h * w2_ref[...], axis=-1, keepdims=True) + b2_ref[0]  # [B, 1]

    # log_softmax over the batch (per-group), matching F.log_softmax(output.view(-1)).
    m = jnp.max(logits, axis=0, keepdims=True)                   # [1, 1]
    shifted = logits - m
    e = jnp.exp(shifted)
    s = jnp.sum(e, axis=0, keepdims=True)                        # [1, 1]
    logp = shifted - jnp.log(s)

    # Single packed output: lane 0 = logits, lane 1 = log_probs.
    out_ref[:, 0:1] = logits
    out_ref[:, 1:2] = logp


def ligand2d_forward(fps, w1, b1, w2, b2, *, group_size):
    """fps: [N, 2048] float32 (N = G * group_size). w1: [100, 2048] bf16,
    b1: [1, 100] f32, w2: [1, 100] f32, b2: [1] f32.
    Returns (logits[N], log_probs[N], probs[N]); softmax is per group."""
    N = fps.shape[0]
    assert N % group_size == 0, "batch must be a whole number of groups"
    assert group_size % 8 == 0, "group_size must be a sublane multiple (8)"
    G = N // group_size

    out = pl.pallas_call(
        _ligand2d_kernel,
        out_shape=jax.ShapeDtypeStruct((N, 2), jnp.float32),
        grid=(G,),
        in_specs=[
            # One fps tile per grid step.
            pl.BlockSpec((group_size, FP_DIM), lambda g: (g, 0)),
            # Weights: index_map always (0, 0) -> DMA'd once, VMEM-resident.
            pl.BlockSpec((HIDDEN, FP_DIM), lambda g: (0, 0)),
            pl.BlockSpec((1, HIDDEN), lambda g: (0, 0)),
            pl.BlockSpec((1, HIDDEN), lambda g: (0, 0)),
            # Scalar bias in SMEM (no lane-padded VMEM tile for one float).
            pl.BlockSpec(memory_space=pltpu.MemorySpace.SMEM),
        ],
        out_specs=pl.BlockSpec((group_size, 2), lambda g: (g, 0)),
        compiler_params=pltpu.CompilerParams(
            dimension_semantics=("parallel",)),
    )(fps, w1, b1, w2, b2)

    logits = out[:, 0]
    log_probs = out[:, 1]
    probs = jnp.exp(log_probs)
    return logits, log_probs, probs


def init_params(key):
    """nn.Linear-style U(-1/sqrt(fan_in), +1/sqrt(fan_in)) init, PyTorch-native
    layouts: w1 [100, 2048] (stored bf16), b1 [1, 100], w2 [1, 100], b2 [1]."""
    k1, k2, k3, k4 = jax.random.split(key, 4)
    bound1 = 1.0 / jnp.sqrt(jnp.float32(FP_DIM))
    bound2 = 1.0 / jnp.sqrt(jnp.float32(HIDDEN))
    w1 = jax.random.uniform(k1, (HIDDEN, FP_DIM), jnp.float32, -bound1, bound1)
    w1 = w1.astype(jnp.bfloat16)  # halves the dominant HBM->VMEM transfer
    b1 = jax.random.uniform(k2, (1, HIDDEN), jnp.float32, -bound1, bound1)
    w2 = jax.random.uniform(k3, (1, HIDDEN), jnp.float32, -bound2, bound2)
    b2 = jax.random.uniform(k4, (1,), jnp.float32, -bound2, bound2)
    return w1, b1, w2, b2


if __name__ == "__main__":
    key = jax.random.PRNGKey(0)
    kp, kx = jax.random.split(key)

    w1, b1, w2, b2 = init_params(kp)

    # Synthetic Morgan-fingerprint-like inputs: G groups of 8 binary vectors.
    GROUPS = 2
    GROUP_SIZE = 8
    N = GROUPS * GROUP_SIZE
    fps = jax.random.bernoulli(kx, p=0.05, shape=(N, FP_DIM)).astype(jnp.float32)

    logits, log_probs, probs = ligand2d_forward(
        fps, w1, b1, w2, b2, group_size=GROUP_SIZE)
    jax.block_until_ready((logits, log_probs, probs))

    # Reference in plain JAX (same bf16-rounded weights, f32 math).
    w1_f32 = w1.astype(jnp.float32)
    h_ref = jnp.maximum(
        jnp.dot(fps, w1_f32.T, precision=lax.Precision.HIGHEST) + b1, 0.0)
    out_ref = jnp.sum(h_ref * w2, axis=-1) + b2[0]                 # [N]
    logp_ref = jax.nn.log_softmax(
        out_ref.reshape(GROUPS, GROUP_SIZE), axis=-1).reshape(-1)
    prob_ref = jax.nn.softmax(
        out_ref.reshape(GROUPS, GROUP_SIZE), axis=-1).reshape(-1)

    assert jnp.allclose(logits, out_ref, atol=1e-4, rtol=1e-4)
    assert jnp.allclose(log_probs, logp_ref, atol=1e-4, rtol=1e-4)
    assert jnp.allclose(probs, prob_ref, atol=1e-4, rtol=1e-4)

    print("KERNEL_OK")
</pallas_src>

<mosaic_0001>
module attributes {stable_mosaic.version = 11 : i64} {
  func.func @_ligand2d_kernel(%arg0: i32, %arg1: memref<8x2048xf32, #tpu.memory_space<vmem>>, %arg2: memref<100x2048xbf16, #tpu.memory_space<vmem>>, %arg3: memref<1x100xf32, #tpu.memory_space<vmem>>, %arg4: memref<1x100xf32, #tpu.memory_space<vmem>>, %arg5: memref<1xf32, #tpu.memory_space<smem>>, %arg6: memref<8x2xf32, #tpu.memory_space<vmem>>) attributes {dimension_semantics = [#tpu.dimension_semantics<parallel>], iteration_bounds = array<i64: 2>, scalar_prefetch = 0 : i64, scratch_operands = 0 : i64, tpu.core_type = #tpu.core_type<tc>, window_params = [{transform_indices = @transform_0, window_bounds = array<i64: 8, 2048>}, {pipeline_mode = #tpu.pipeline_mode<synchronous>, transform_indices = @transform_1, window_bounds = array<i64: 100, 2048>}, {pipeline_mode = #tpu.pipeline_mode<synchronous>, transform_indices = @transform_2, window_bounds = array<i64: 1, 100>}, {pipeline_mode = #tpu.pipeline_mode<synchronous>, transform_indices = @transform_3, window_bounds = array<i64: 1, 100>}, {transform_indices = @transform_4, window_bounds = array<i64: 1>}, {transform_indices = @transform_5, window_bounds = array<i64: 8, 2>}]} {
    %c0 = arith.constant 0 : index
    %c0_0 = arith.constant 0 : index
    %0 = vector.load %arg1[%c0, %c0_0] : memref<8x2048xf32, #tpu.memory_space<vmem>>, vector<8x2048xf32>
    %1 = arith.truncf %0 : vector<8x2048xf32> to vector<8x2048xbf16>
    %c0_1 = arith.constant 0 : index
    %c0_2 = arith.constant 0 : index
    %2 = vector.load %arg2[%c0_1, %c0_2] : memref<100x2048xbf16, #tpu.memory_space<vmem>>, vector<100x2048xbf16>
    %cst = arith.constant dense<0.000000e+00> : vector<8x100xf32>
    %3 = tpu.matmul %1, %2, %cst {dimension_numbers = #tpu.dot_dimension_numbers<[1], [1], [0], [0], [0, 0, 1, 0], [], []>} : vector<8x2048xbf16>, vector<100x2048xbf16>, vector<8x100xf32> -> vector<8x100xf32>
    %c0_3 = arith.constant 0 : index
    %c0_4 = arith.constant 0 : index
    %4 = vector.load %arg3[%c0_3, %c0_4] : memref<1x100xf32, #tpu.memory_space<vmem>>, vector<1x100xf32>
    %5 = vector.broadcast %4 : vector<1x100xf32> to vector<8x100xf32>
    %6 = arith.addf %3, %5 : vector<8x100xf32>
    %cst_5 = arith.constant 0.000000e+00 : f32
    %7 = vector.broadcast %cst_5 : f32 to vector<8x100xf32>
    %8 = arith.maximumf %6, %7 : vector<8x100xf32>
    %c0_6 = arith.constant 0 : index
    %c0_7 = arith.constant 0 : index
    %9 = vector.load %arg4[%c0_6, %c0_7] : memref<1x100xf32, #tpu.memory_space<vmem>>, vector<1x100xf32>
    %10 = vector.broadcast %9 : vector<1x100xf32> to vector<8x100xf32>
    %11 = arith.mulf %8, %10 : vector<8x100xf32>
    %cst_8 = arith.constant dense<0.000000e+00> : vector<8xf32>
    %12 = vector.multi_reduction <add>, %11, %cst_8 [1] : vector<8x100xf32> to vector<8xf32>
    %13 = vector.shape_cast %12 : vector<8xf32> to vector<8x1xf32>
    %c0_9 = arith.constant 0 : index
    %14 = memref.load %arg5[%c0_9] : memref<1xf32, #tpu.memory_space<smem>>
    %15 = vector.broadcast %14 : f32 to vector<8x1xf32>
    %16 = arith.addf %13, %15 : vector<8x1xf32>
    %cst_10 = arith.constant dense<0xFF800000> : vector<1xf32>
    %17 = vector.multi_reduction <maximumf>, %16, %cst_10 [0] : vector<8x1xf32> to vector<1xf32>
    %18 = vector.shape_cast %17 : vector<1xf32> to vector<1x1xf32>
    %19 = vector.broadcast %18 : vector<1x1xf32> to vector<8x1xf32>
    %20 = arith.subf %16, %19 : vector<8x1xf32>
    %21 = math.exp %20 : vector<8x1xf32>
    %cst_11 = arith.constant dense<0.000000e+00> : vector<1xf32>
    %22 = vector.multi_reduction <add>, %21, %cst_11 [0] : vector<8x1xf32> to vector<1xf32>
    %23 = vector.shape_cast %22 : vector<1xf32> to vector<1x1xf32>
    %24 = math.log %23 : vector<1x1xf32>
    %25 = vector.broadcast %24 : vector<1x1xf32> to vector<8x1xf32>
    %26 = arith.subf %20, %25 : vector<8x1xf32>
    %c0_12 = arith.constant 0 : index
    %c0_13 = arith.constant 0 : index
    %27 = vector.load %arg6[%c0_12, %c0_13] : memref<8x2xf32, #tpu.memory_space<vmem>>, vector<8x1xf32>
    tpu.vector_store %arg6[%c0_12, %c0_13], %16 {strides = array<i32>} : memref<8x2xf32, #tpu.memory_space<vmem>>, vector<8x1xf32>,
    %c0_14 = arith.constant 0 : index
    %c1 = arith.constant 1 : index
    %28 = vector.load %arg6[%c0_14, %c1] : memref<8x2xf32, #tpu.memory_space<vmem>>, vector<8x1xf32>
    tpu.vector_store %arg6[%c0_14, %c1], %26 {strides = array<i32>} : memref<8x2xf32, #tpu.memory_space<vmem>>, vector<8x1xf32>,
    return
  }
  func.func @transform_0(%arg0: i32) -> (i32, i32) {
    %c0_i32 = arith.constant 0 : i32
    %c0_i32_0 = arith.constant 0 : i32
    return %arg0, %c0_i32 : i32, i32
  }
  func.func @transform_1(%arg0: i32) -> (i32, i32) {
    %c0_i32 = arith.constant 0 : i32
    %c0_i32_0 = arith.constant 0 : i32
    %c0_i32_1 = arith.constant 0 : i32
    return %c0_i32, %c0_i32_0 : i32, i32
  }
  func.func @transform_2(%arg0: i32) -> (i32, i32) {
    %c0_i32 = arith.constant 0 : i32
    %c0_i32_0 = arith.constant 0 : i32
    %c0_i32_1 = arith.constant 0 : i32
    return %c0_i32, %c0_i32_0 : i32, i32
  }
  func.func @transform_3(%arg0: i32) -> (i32, i32) {
    %c0_i32 = arith.constant 0 : i32
    %c0_i32_0 = arith.constant 0 : i32
    %c0_i32_1 = arith.constant 0 : i32
    return %c0_i32, %c0_i32_0 : i32, i32
  }
  func.func @transform_4(%arg0: i32) -> i32 {
    %c0_i32 = arith.constant 0 : i32
    %c0_i32_0 = arith.constant 0 : i32
    return %c0_i32 : i32
  }
  func.func @transform_5(%arg0: i32) -> (i32, i32) {
    %c0_i32 = arith.constant 0 : i32
    %c0_i32_0 = arith.constant 0 : i32
    return %arg0, %c0_i32 : i32, i32
  }
}

</mosaic_0001>

<llo_original>
// kernel: tpu_custom_call.1
$region0: #{tpu_custom_call.1}
  #allocation0 [shape = 'u32[]', space=smem, size = 0x4, offset = 0x4, fixed_abs, tag = 'smem constant byte address 0x4 - core index']
  #allocation1 [shape = 'u32[144,128]{1,0:T(1,128)}', space=vmem, size = 0x12000, scoped, tag = 'internal scratch']
  #allocation2 [shape = 'f32[1]{0:T(128)S(6)}', space=smem, size = 0x200, scoped, tag = 'scoped memory for tpu_custom_call.1']
  %s0 = inlined_call_operand.hbm [shape: f32[16,2048], index: 0, kind: input, shape index: {}]
  %s1 = inlined_call_operand.hbm [shape: bf16[100,2048], index: 1, kind: input, shape index: {}]
  %s2 = inlined_call_operand.vmem [shape: f32[1,100], index: 2, kind: input, shape index: {}]
  %s3 = inlined_call_operand.vmem [shape: f32[1,100], index: 3, kind: input, shape index: {}]
  %s4 = inlined_call_operand.<no memory space> [shape: f32[1], index: 4, kind: input, shape index: {}]
  %s5 = inlined_call_operand.vmem [shape: f32[16,2], index: 5, kind: output, shape index: {}]
  %s6 = sld [smem:[#allocation0]]
  $region61: #{tpu_custom_call.1} parent=0
    _
  %s8 = ssub.s32 1, %s6
  %s9 = scalar_select 0, %s8, %s6
  %10 = sst [smem:[#allocation2]] %s4
  $region1: #{tpu_custom_call.1} parent=0
    #allocation3 [shape = 'u8[131072]{0}', space=vmem, size = 0x20000, scoped, tag = 'input window, operand 0']
    #allocation4 [shape = 's32[2]{0}', space=sflag, size = 0x8, scoped, tag = 'scoped memory for tpu_custom_call.1']
    #allocation5 [shape = 'u8[425984]{0}', space=vmem, size = 0x68000, scoped, tag = 'input window, operand 1, single buffered']
    #allocation6 [shape = 's32[1]{0}', space=sflag, size = 0x4, scoped, tag = 'scoped memory for tpu_custom_call.1']
    %11 = vsyncpa [#allocation4], 0
    %s12 = scalar_lea.sflag [#allocation4], 1
    %13 = vsyncpa %s12, 0
    %14 = vsyncpa [#allocation6], 0
    loop: start=0, step=1, limit=4
    $region2: #{tpu_custom_call.1} parent=1 // loop_pre_header
      _
    $region3: #{tpu_custom_call.1} parent=1 // loop_header
      %s16 = sphi 0, %s20
      %p17 = scmp.ge.s32.totalorder %s16, 4
      %s26 = sphi 0, %s28
      %s29 = sphi 0, %s26
      %s30 = sphi 0, %s29
      %s46 = sphi 0, %s30
      %s50 = sphi 0, %s50
      %s52 = sphi 0, %s50
      %s53 = sphi 0, %s52
      %s67 = sphi 0, %s53
      %s71 = sphi 0, %s71
      %s73 = sphi 0, %s71
      %s74 = sphi 0, %s73
      %s88 = sphi 0, %s74
      %s92 = sphi 0, %s92
      %s94 = sphi 0, %s92
      %s95 = sphi 0, %s94
      %s109 = sphi 0, %s95
      %s113 = sphi 0, %s113
      %s115 = sphi 0, %s113
      %s116 = sphi 0, %s115
      %s130 = sphi 0, %s116
      %s136 = sphi 0, %s138
      %s139 = sphi 0, %s136
      %s140 = sphi 0, %s139
      %s156 = sphi 0, %s140
    $region4: #{tpu_custom_call.1} parent=1 // loop_header_branch
      %19 = sbr.rel (%p17) target = $region8
    $region5: #{tpu_custom_call.1} parent=1 // loop_body
      %s21 = ssub.s32 %s16, 1
      %s22 = ssub.s32 %s16, 2
      %s23 = sadd.s32 %s16, 1
      %s24 = ssub.s32 %s16, %s23
      %p25 = scmp.eq.s32.totalorder %s24, 0
      %s27 = sadd.s32 %s26, 1
      %s28 = scalar_select %p25, %s26, %s27
      %p31 = pneg %p25
      %p32 = scmp.eq.s32.totalorder %s16, 1
      %p33 = por %p31, %p32
      %p34 = scmp.ne.s32.totalorder %s26, %s29
      %p35 = scmp.eq.s32.totalorder %s16, 0
      %p36 = por %p34, %p35
      %p37 = scmp.ne.s32.totalorder %s26, %s29
      %p38 = scmp.eq.s32.totalorder %s21, 1
      %p39 = por %p37, %p38
      %p40 = scmp.ne.s32.totalorder %s29, %s30
      %p41 = scmp.eq.s32.totalorder %s21, 0
      %p42 = por %p40, %p41
      %p43 = scmp.ne.s32.totalorder %s29, %s30
      %p44 = scmp.eq.s32.totalorder %s22, 1
      %p45 = por %p43, %p44
      %p47 = scmp.ne.s32.totalorder %s30, %s46
      %p48 = scmp.eq.s32.totalorder %s22, 0
      %p49 = por %p47, %p48
      %s51 = sadd.s32 %s50, 1
      %p54 = scmp.eq.s32.totalorder %s16, 1
      %p55 = scmp.ne.s32.totalorder %s50, %s52
      %p56 = scmp.eq.s32.totalorder %s16, 0
      %p57 = por %p55, %p56
      %p58 = scmp.ne.s32.totalorder %s50, %s52
      %p59 = scmp.eq.s32.totalorder %s21, 1
      %p60 = por %p58, %p59
      %p61 = scmp.ne.s32.totalorder %s52, %s53
      %p62 = scmp.eq.s32.totalorder %s21, 0
      %p63 = por %p61, %p62
      %p64 = scmp.ne.s32.totalorder %s52, %s53
      %p65 = scmp.eq.s32.totalorder %s22, 1
      %p66 = por %p64, %p65
      %p68 = scmp.ne.s32.totalorder %s53, %s67
      %p69 = scmp.eq.s32.totalorder %s22, 0
      %p70 = por %p68, %p69
      %s72 = sadd.s32 %s71, 1
      %p75 = scmp.eq.s32.totalorder %s16, 1
      %p76 = scmp.ne.s32.totalorder %s71, %s73
      %p77 = scmp.eq.s32.totalorder %s16, 0
      %p78 = por %p76, %p77
      %p79 = scmp.ne.s32.totalorder %s71, %s73
      %p80 = scmp.eq.s32.totalorder %s21, 1
      %p81 = por %p79, %p80
      %p82 = scmp.ne.s32.totalorder %s73, %s74
      %p83 = scmp.eq.s32.totalorder %s21, 0
      %p84 = por %p82, %p83
      %p85 = scmp.ne.s32.totalorder %s73, %s74
      %p86 = scmp.eq.s32.totalorder %s22, 1
      %p87 = por %p85, %p86
      %p89 = scmp.ne.s32.totalorder %s74, %s88
      %p90 = scmp.eq.s32.totalorder %s22, 0
      %p91 = por %p89, %p90
      %s93 = sadd.s32 %s92, 1
      %p96 = scmp.eq.s32.totalorder %s16, 1
      %p97 = scmp.ne.s32.totalorder %s92, %s94
      %p98 = scmp.eq.s32.totalorder %s16, 0
      %p99 = por %p97, %p98
      %p100 = scmp.ne.s32.totalorder %s92, %s94
      %p101 = scmp.eq.s32.totalorder %s21, 1
      %p102 = por %p100, %p101
      %p103 = scmp.ne.s32.totalorder %s94, %s95
      %p104 = scmp.eq.s32.totalorder %s21, 0
      %p105 = por %p103, %p104
      %p106 = scmp.ne.s32.totalorder %s94, %s95
      %p107 = scmp.eq.s32.totalorder %s22, 1
      %p108 = por %p106, %p107
      %p110 = scmp.ne.s32.totalorder %s95, %s109
      %p111 = scmp.eq.s32.totalorder %s22, 0
      %p112 = por %p110, %p111
      %s114 = sadd.s32 %s113, 1
      %p117 = scmp.eq.s32.totalorder %s16, 1
      %p118 = scmp.ne.s32.totalorder %s113, %s115
      %p119 = scmp.eq.s32.totalorder %s16, 0
      %p120 = por %p118, %p119
      %p121 = scmp.ne.s32.totalorder %s113, %s115
      %p122 = scmp.eq.s32.totalorder %s21, 1
      %p123 = por %p121, %p122
      %p124 = scmp.ne.s32.totalorder %s115, %s116
      %p125 = scmp.eq.s32.totalorder %s21, 0
      %p126 = por %p124, %p125
      %p127 = scmp.ne.s32.totalorder %s115, %s116
      %p128 = scmp.eq.s32.totalorder %s22, 1
      %p129 = por %p127, %p128
      %p131 = scmp.ne.s32.totalorder %s116, %s130
      %p132 = scmp.eq.s32.totalorder %s22, 0
      %p133 = por %p131, %p132
      %s134 = ssub.s32 %s16, %s23
      %p135 = scmp.eq.s32.totalorder %s134, 0
      %s137 = sadd.s32 %s136, 1
      %s138 = scalar_select %p135, %s136, %s137
      %p141 = pneg %p135
      %p142 = scmp.eq.s32.totalorder %s16, 1
      %p143 = por %p141, %p142
      %p144 = scmp.ne.s32.totalorder %s136, %s139
      %p145 = scmp.eq.s32.totalorder %s16, 0
      %p146 = por %p144, %p145
      %p147 = scmp.ne.s32.totalorder %s136, %s139
      %p148 = scmp.eq.s32.totalorder %s21, 1
      %p149 = por %p147, %p148
      %p150 = scmp.ne.s32.totalorder %s139, %s140
      %p151 = scmp.eq.s32.totalorder %s21, 0
      %p152 = por %p150, %p151
      %p153 = scmp.ne.s32.totalorder %s139, %s140
      %p154 = scmp.eq.s32.totalorder %s22, 1
      %p155 = por %p153, %p154
      %p157 = scmp.ne.s32.totalorder %s140, %s156
      %p158 = scmp.eq.s32.totalorder %s22, 0
      %p159 = por %p157, %p158
      %p160 = scmp.le.s32.totalorder 1, %s16
      %p161 = scmp.lt.s32.totalorder %s16, 3
      %p162 = pnand %p160, %p161
      %p163 = pneg %p162
      // Predicated region
      $region9: #{tpu_custom_call.1} parent=5 // pred_check
        _
      $region10: #{tpu_custom_call.1} parent=5 // pred_check_branch
        %165 = sbr.rel (%p162) target = $region12
      $region11: #{tpu_custom_call.1} parent=5 // pred_region
        %s166 = ssub.s32 %s16, 1
        // Predicated region
        $region13: #{tpu_custom_call.1} parent=11 // pred_check
          %p167 = pneg %p63
        $region14: #{tpu_custom_call.1} parent=11 // pred_check_branch
          %169 = sbr.rel (%p167) target = $region16
        $region15: #{tpu_custom_call.1} parent=11 // pred_region
          %s171 = ssub.s32 13312, 13312
          %172 = vsyncadd [#allocation6], %s171
          %s173 = sshll.u32 [#allocation5], 4
          %s174 = int_to_ptr.vmem [resolvable:$true] %s173
          %179 = dma.hbm_to_vmem [thread:$0]  %s1, 13312, %s174, [#allocation6], 1024, 1024, 64
        $region16: #{tpu_custom_call.1} parent=11 // pred_fallthru
          _
        // Predicated region
        $region17: #{tpu_custom_call.1} parent=11 // pred_check
          %p180 = pneg %p84
        $region18: #{tpu_custom_call.1} parent=11 // pred_check_branch
          %182 = sbr.rel (%p180) target = $region20
        $region19: #{tpu_custom_call.1} parent=11 // pred_region
          _
        $region20: #{tpu_custom_call.1} parent=11 // pred_fallthru
          _
        // Predicated region
        $region21: #{tpu_custom_call.1} parent=11 // pred_check
          %p183 = pneg %p105
        $region22: #{tpu_custom_call.1} parent=11 // pred_check_branch
          %185 = sbr.rel (%p183) target = $region24
        $region23: #{tpu_custom_call.1} parent=11 // pred_region
          _
        $region24: #{tpu_custom_call.1} parent=11 // pred_fallthru
          _
        // Predicated region
        $region25: #{tpu_custom_call.1} parent=11 // pred_check
          %p186 = pneg %p126
        $region26: #{tpu_custom_call.1} parent=11 // pred_check_branch
          %188 = sbr.rel (%p186) target = $region28
        $region27: #{tpu_custom_call.1} parent=11 // pred_region
          _
        $region28: #{tpu_custom_call.1} parent=11 // pred_fallthru
          _
      $region12: #{tpu_custom_call.1} parent=5 // pred_fallthru
        _
      %p189 = scmp.lt.s32.totalorder %s16, 2
      // Predicated region
      $region29: #{tpu_custom_call.1} parent=5 // pred_check
        %p190 = pneg %p189
      $region30: #{tpu_custom_call.1} parent=5 // pred_check_branch
        %192 = sbr.rel (%p190) target = $region32
      $region31: #{tpu_custom_call.1} parent=5 // pred_region
        // Predicated region
        $region33: #{tpu_custom_call.1} parent=31 // pred_check
          %p193 = pneg %p36
        $region34: #{tpu_custom_call.1} parent=31 // pred_check_branch
          %195 = sbr.rel (%p193) target = $region36
        $region35: #{tpu_custom_call.1} parent=31 // pred_region
          %s196 = sand.u32 %s26, 1
          %s197 = scalar_lea.sflag [#allocation4], %s196
          %s198 = sand.u32 %s26, 1
          %s199 = smul.addr %s198, 128
          %s200 = scalar_lea.vmem [#allocation3], %s199
          %s202 = ssub.s32 2048, 2048
          %203 = vsyncadd %s197, %s202
          %s204 = smul.addr %s16, 16
          %s205 = smul.addr %s204, 128
          %s206 = scalar_lea.hbm %s0, %s205
          %s208 = sshll.u32 %s200, 4
          %s209 = int_to_ptr.vmem [resolvable:$true] %s208
          %211 = dma.hbm_to_vmem [thread:$0]  %s206, 2048, %s209, %s197
        $region36: #{tpu_custom_call.1} parent=31 // pred_fallthru
          _
      $region32: #{tpu_custom_call.1} parent=5 // pred_fallthru
        _
      %p212 = scmp.le.s32.totalorder 1, %s16
      %p213 = scmp.lt.s32.totalorder %s16, 3
      %p214 = pnand %p212, %p213
      %p215 = pneg %p214
      // Predicated region
      $region37: #{tpu_custom_call.1} parent=5 // pred_check
        _
      $region38: #{tpu_custom_call.1} parent=5 // pred_check_branch
        %217 = sbr.rel (%p214) target = $region40
      $region39: #{tpu_custom_call.1} parent=5 // pred_region
        %s218 = ssub.s32 %s16, 1
        %s219 = sand.u32 %s29, 1
        %s220 = scalar_lea.sflag [#allocation4], %s219
        %s221 = sand.u32 %s29, 1
        %s222 = smul.addr %s221, 128
        %s223 = scalar_lea.vmem [#allocation3], %s222
        // Predicated region
        $region41: #{tpu_custom_call.1} parent=39 // pred_check
          %p224 = pneg %p42
        $region42: #{tpu_custom_call.1} parent=39 // pred_check_branch
          %226 = sbr.rel (%p224) target = $region44
        $region43: #{tpu_custom_call.1} parent=39 // pred_region
          %227 = dma.done %s220, 2048
        $region44: #{tpu_custom_call.1} parent=39 // pred_fallthru
          _
        // Predicated region
        $region45: #{tpu_custom_call.1} parent=39 // pred_check
          %p228 = pneg %p63
        $region46: #{tpu_custom_call.1} parent=39 // pred_check_branch
          %230 = sbr.rel (%p228) target = $region48
        $region47: #{tpu_custom_call.1} parent=39 // pred_region
          %231 = dma.done [#allocation6], 13312
        $region48: #{tpu_custom_call.1} parent=39 // pred_fallthru
          _
        %s232 = sand.u32 %s29, 1
        %s233 = scalar_lea.sflag [#allocation4], %s232
        %s234 = sand.u32 %s29, 1
        %s235 = smul.addr %s234, 128
        %s236 = scalar_lea.vmem [#allocation3], %s235
        %p237 = pneg %p42
        %p238 = pneg %p39
        %p239 = pneg %p63
        %p240 = pneg %p60
        %p241 = pneg %p84
        %p242 = pneg %p81
        %p243 = pneg %p105
        %p244 = pneg %p102
        %p245 = pneg %p126
        %p246 = pneg %p123
        %p247 = pneg %p152
        %p248 = pneg %p149
        %p249 = scmp.lt.s32.totalorder %s21, 1
        %s250 = scalar_select %p249, %s21, 1
        %s251 = smul.addr %s250, 8
        %s252 = scalar_lea.vmem %s5, %s251
        %p253 = scmp.lt.s32.totalorder %s21, 1
        %s254 = scalar_select %p253, %s21, 1
        %s255 = smul.addr %s254, 8
        %s256 = scalar_lea.vmem %s5, %s255
        %v258 = vld [vmem:[%s223] sm:$0xff]
        %v259 = vld [vmem:[%s223 + $0x8] sm:$0xff]
        %v260 = vld [vmem:[%s223 + $0x10] sm:$0xff]
        %v261 = vld [vmem:[%s223 + $0x18] sm:$0xff]
        %v262 = vld [vmem:[%s223 + $0x20] sm:$0xff]
        %v263 = vld [vmem:[%s223 + $0x28] sm:$0xff]
        %v264 = vld [vmem:[%s223 + $0x30] sm:$0xff]
        %v265 = vld [vmem:[%s223 + $0x38] sm:$0xff]
        %v266 = vld [vmem:[%s223 + $0x40] sm:$0xff]
        %v267 = vld [vmem:[%s223 + $0x48] sm:$0xff]
        %v268 = vld [vmem:[%s223 + $0x50] sm:$0xff]
        %v269 = vld [vmem:[%s223 + $0x58] sm:$0xff]
        %v270 = vld [vmem:[%s223 + $0x60] sm:$0xff]
        %v271 = vld [vmem:[%s223 + $0x68] sm:$0xff]
        %v272 = vld [vmem:[%s223 + $0x70] sm:$0xff]
        %v273 = vld [vmem:[%s223 + $0x78] sm:$0xff]
        %v274 = vpack.c.bf16 %v258, %v258
        %v275 = vpack.c.bf16 %v259, %v259
        %v276 = vpack.c.bf16 %v260, %v260
        %v277 = vpack.c.bf16 %v261, %v261
        %v278 = vpack.c.bf16 %v262, %v262
        %v279 = vpack.c.bf16 %v263, %v263
        %v280 = vpack.c.bf16 %v264, %v264
        %v281 = vpack.c.bf16 %v265, %v265
        %v282 = vpack.c.bf16 %v266, %v266
        %v283 = vpack.c.bf16 %v267, %v267
        %v284 = vpack.c.bf16 %v268, %v268
        %v285 = vpack.c.bf16 %v269, %v269
        %v286 = vpack.c.bf16 %v270, %v270
        %v287 = vpack.c.bf16 %v271, %v271
        %v288 = vpack.c.bf16 %v272, %v272
        %v289 = vpack.c.bf16 %v273, %v273
        %v290 = vld [vmem:[#allocation5] sm:$0xff]
        %v291 = vld [vmem:[#allocation5 + $0x8] sm:$0xff]
        %v292 = vld [vmem:[#allocation5 + $0x10] sm:$0xff]
        %v293 = vld [vmem:[#allocation5 + $0x18] sm:$0xff]
        %v294 = vld [vmem:[#allocation5 + $0x20] sm:$0xff]
        %v295 = vld [vmem:[#allocation5 + $0x28] sm:$0xff]
        %v296 = vld [vmem:[#allocation5 + $0x30] sm:$0xff]
        %v297 = vld [vmem:[#allocation5 + $0x38] sm:$0xff]
        %v298 = vld [vmem:[#allocation5 + $0x40] sm:$0xff]
        %v299 = vld [vmem:[#allocation5 + $0x48] sm:$0xff]
        %v300 = vld [vmem:[#allocation5 + $0x50] sm:$0xff]
        %v301 = vld [vmem:[#allocation5 + $0x58] sm:$0xff]
        %v302 = vld [vmem:[#allocation5 + $0x60] sm:$0xff]
        %v303 = vld [vmem:[#allocation5 + $0x68] sm:$0xff]
        %v304 = vld [vmem:[#allocation5 + $0x70] sm:$0xff]
        %v305 = vld [vmem:[#allocation5 + $0x78] sm:$0xff]
        %v306 = vld [vmem:[#allocation5 + $0x80] sm:$0xff]
        %v307 = vld [vmem:[#allocation5 + $0x88] sm:$0xff]
        %v308 = vld [vmem:[#allocation5 + $0x90] sm:$0xff]
        %v309 = vld [vmem:[#allocation5 + $0x98] sm:$0xff]
        %v310 = vld [vmem:[#allocation5 + $0xa0] sm:$0xff]
        %v311 = vld [vmem:[#allocation5 + $0xa8] sm:$0xff]
        %v312 = vld [vmem:[#allocation5 + $0xb0] sm:$0xff]
        %v313 = vld [vmem:[#allocation5 + $0xb8] sm:$0xff]
        %v314 = vld [vmem:[#allocation5 + $0xc0] sm:$0xff]
        %v315 = vld [vmem:[#allocation5 + $0xc8] sm:$0xff]
        %v316 = vld [vmem:[#allocation5 + $0xd0] sm:$0xff]
        %v317 = vld [vmem:[#allocation5 + $0xd8] sm:$0xff]
        %v318 = vld [vmem:[#allocation5 + $0xe0] sm:$0xff]
        %v319 = vld [vmem:[#allocation5 + $0xe8] sm:$0xff]
        %v320 = vld [vmem:[#allocation5 + $0xf0] sm:$0xff]
        %v321 = vld [vmem:[#allocation5 + $0xf8] sm:$0xff]
        %v322 = vld [vmem:[#allocation5 + $0x100] sm:$0xff]
        %v323 = vld [vmem:[#allocation5 + $0x108] sm:$0xff]
        %v324 = vld [vmem:[#allocation5 + $0x110] sm:$0xff]
        %v325 = vld [vmem:[#allocation5 + $0x118] sm:$0xff]
        %v326 = vld [vmem:[#allocation5 + $0x120] sm:$0xff]
        %v327 = vld [vmem:[#allocation5 + $0x128] sm:$0xff]
        %v328 = vld [vmem:[#allocation5 + $0x130] sm:$0xff]
        %v329 = vld [vmem:[#allocation5 + $0x138] sm:$0xff]
        %v330 = vld [vmem:[#allocation5 + $0x140] sm:$0xff]
        %v331 = vld [vmem:[#allocation5 + $0x148] sm:$0xff]
        %v332 = vld [vmem:[#allocation5 + $0x150] sm:$0xff]
        %v333 = vld [vmem:[#allocation5 + $0x158] sm:$0xff]
        %v334 = vld [vmem:[#allocation5 + $0x160] sm:$0xff]
        %v335 = vld [vmem:[#allocation5 + $0x168] sm:$0xff]
        %v336 = vld [vmem:[#allocation5 + $0x170] sm:$0xff]
        %v337 = vld [vmem:[#allocation5 + $0x178] sm:$0xff]
        %v338 = vld [vmem:[#allocation5 + $0x180] sm:$0xff]
        %v339 = vld [vmem:[#allocation5 + $0x188] sm:$0xff]
        %v340 = vld [vmem:[#allocation5 + $0x190] sm:$0xff]
        %v341 = vld [vmem:[#allocation5 + $0x198] sm:$0xff]
        %v342 = vld [vmem:[#allocation5 + $0x1a0] sm:$0xff]
        %v343 = vld [vmem:[#allocation5 + $0x1a8] sm:$0xff]
        %v344 = vld [vmem:[#allocation5 + $0x1b0] sm:$0xff]
        %v345 = vld [vmem:[#allocation5 + $0x1b8] sm:$0xff]
        %v346 = vld [vmem:[#allocation5 + $0x1c0] sm:$0xff]
        %v347 = vld [vmem:[#allocation5 + $0x1c8] sm:$0xff]
        %v348 = vld [vmem:[#allocation5 + $0x1d0] sm:$0xff]
        %v349 = vld [vmem:[#allocation5 + $0x1d8] sm:$0xff]
        %v350 = vld [vmem:[#allocation5 + $0x1e0] sm:$0xff]
        %v351 = vld [vmem:[#allocation5 + $0x1e8] sm:$0xff]
        %v352 = vld [vmem:[#allocation5 + $0x1f0] sm:$0xff]
        %v353 = vld [vmem:[#allocation5 + $0x1f8] sm:$0xff]
        %v354 = vld [vmem:[#allocation5 + $0x200] sm:$0xff]
        %v355 = vld [vmem:[#allocation5 + $0x208] sm:$0xff]
        %v356 = vld [vmem:[#allocation5 + $0x210] sm:$0xff]
        %v357 = vld [vmem:[#allocation5 + $0x218] sm:$0xff]
        %v358 = vld [vmem:[#allocation5 + $0x220] sm:$0xff]
        %v359 = vld [vmem:[#allocation5 + $0x228] sm:$0xff]
        %v360 = vld [vmem:[#allocation5 + $0x230] sm:$0xff]
        %v361 = vld [vmem:[#allocation5 + $0x238] sm:$0xff]
        %v362 = vld [vmem:[#allocation5 + $0x240] sm:$0xff]
        %v363 = vld [vmem:[#allocation5 + $0x248] sm:$0xff]
        %v364 = vld [vmem:[#allocation5 + $0x250] sm:$0xff]
        %v365 = vld [vmem:[#allocation5 + $0x258] sm:$0xff]
        %v366 = vld [vmem:[#allocation5 + $0x260] sm:$0xff]
        %v367 = vld [vmem:[#allocation5 + $0x268] sm:$0xff]
        %v368 = vld [vmem:[#allocation5 + $0x270] sm:$0xff]
        %v369 = vld [vmem:[#allocation5 + $0x278] sm:$0xff]
        %v370 = vld [vmem:[#allocation5 + $0x280] sm:$0xff]
        %v371 = vld [vmem:[#allocation5 + $0x288] sm:$0xff]
        %v372 = vld [vmem:[#allocation5 + $0x290] sm:$0xff]
        %v373 = vld [vmem:[#allocation5 + $0x298] sm:$0xff]
        %v374 = vld [vmem:[#allocation5 + $0x2a0] sm:$0xff]
        %v375 = vld [vmem:[#allocation5 + $0x2a8] sm:$0xff]
        %v376 = vld [vmem:[#allocation5 + $0x2b0] sm:$0xff]
        %v377 = vld [vmem:[#allocation5 + $0x2b8] sm:$0xff]
        %v378 = vld [vmem:[#allocation5 + $0x2c0] sm:$0xff]
        %v379 = vld [vmem:[#allocation5 + $0x2c8] sm:$0xff]
        %v380 = vld [vmem:[#allocation5 + $0x2d0] sm:$0xff]
        %v381 = vld [vmem:[#allocation5 + $0x2d8] sm:$0xff]
        %v382 = vld [vmem:[#allocation5 + $0x2e0] sm:$0xff]
        %v383 = vld [vmem:[#allocation5 + $0x2e8] sm:$0xff]
        %v384 = vld [vmem:[#allocation5 + $0x2f0] sm:$0xff]
        %v385 = vld [vmem:[#allocation5 + $0x2f8] sm:$0xff]
        %v386 = vld [vmem:[#allocation5 + $0x300] sm:$0x33]
        %v387 = vld [vmem:[#allocation5 + $0x308] sm:$0x33]
        %v388 = vld [vmem:[#allocation5 + $0x310] sm:$0x33]
        %v389 = vld [vmem:[#allocation5 + $0x318] sm:$0x33]
        %v390 = vld [vmem:[#allocation5 + $0x320] sm:$0x33]
        %v391 = vld [vmem:[#allocation5 + $0x328] sm:$0x33]
        %v392 = vld [vmem:[#allocation5 + $0x330] sm:$0x33]
        %v393 = vld [vmem:[#allocation5 + $0x338] sm:$0x33]
        %v394 = vld [vmem:[%s2] sm:$0x1]
        %v396 = vlaneseq
        %v397 = vshrl.u32 %v396, 7
        %v398 = vsub.s32 0, %v397
        %v399 = vrot.slane %v394, %v398
        %v505 = vunpack.c.l.b16 %v290
        %v506 = vunpack.c.h.b16 %v290
        %v507 = vunpack.c.l.b16 %v291
        %v508 = vunpack.c.h.b16 %v291
        %v509 = vunpack.c.l.b16 %v292
        %v510 = vunpack.c.h.b16 %v292
        %v511 = vunpack.c.l.b16 %v293
        %v512 = vunpack.c.h.b16 %v293
        %v513 = vunpack.c.l.b16 %v294
        %v514 = vunpack.c.h.b16 %v294
        %v515 = vunpack.c.l.b16 %v295
        %v516 = vunpack.c.h.b16 %v295
        %v517 = vunpack.c.l.b16 %v296
        %v518 = vunpack.c.h.b16 %v296
        %v519 = vunpack.c.l.b16 %v297
        %v520 = vunpack.c.h.b16 %v297
        %v521 = vunpack.c.l.b16 %v298
        %v522 = vunpack.c.h.b16 %v298
        %v523 = vunpack.c.l.b16 %v299
        %v524 = vunpack.c.h.b16 %v299
        %v525 = vunpack.c.l.b16 %v300
        %v526 = vunpack.c.h.b16 %v300
        %v527 = vunpack.c.l.b16 %v301
        %v528 = vunpack.c.h.b16 %v301
        %v529 = vunpack.c.l.b16 %v302
        %v530 = vunpack.c.h.b16 %v302
        %v531 = vunpack.c.l.b16 %v303
        %v532 = vunpack.c.h.b16 %v303
        %v533 = vunpack.c.l.b16 %v304
        %v534 = vunpack.c.h.b16 %v304
        %v535 = vunpack.c.l.b16 %v305
        %v536 = vunpack.c.h.b16 %v305
        %v537 = vunpack.c.l.b16 %v306
        %v538 = vunpack.c.h.b16 %v306
        %v539 = vunpack.c.l.b16 %v307
        %v540 = vunpack.c.h.b16 %v307
        %v541 = vunpack.c.l.b16 %v308
        %v542 = vunpack.c.h.b16 %v308
        %v543 = vunpack.c.l.b16 %v309
        %v544 = vunpack.c.h.b16 %v309
        %v545 = vunpack.c.l.b16 %v310
        %v546 = vunpack.c.h.b16 %v310
        %v547 = vunpack.c.l.b16 %v311
        %v548 = vunpack.c.h.b16 %v311
        %v549 = vunpack.c.l.b16 %v312
        %v550 = vunpack.c.h.b16 %v312
        %v551 = vunpack.c.l.b16 %v313
        %v552 = vunpack.c.h.b16 %v313
        %v553 = vunpack.c.l.b16 %v314
        %v554 = vunpack.c.h.b16 %v314
        %v555 = vunpack.c.l.b16 %v315
        %v556 = vunpack.c.h.b16 %v315
        %v557 = vunpack.c.l.b16 %v316
        %v558 = vunpack.c.h.b16 %v316
        %v559 = vunpack.c.l.b16 %v317
        %v560 = vunpack.c.h.b16 %v317
        %v561 = vunpack.c.l.b16 %v318
        %v562 = vunpack.c.h.b16 %v318
        %v563 = vunpack.c.l.b16 %v319
        %v564 = vunpack.c.h.b16 %v319
        %v565 = vunpack.c.l.b16 %v320
        %v566 = vunpack.c.h.b16 %v320
        %v567 = vunpack.c.l.b16 %v321
        %v568 = vunpack.c.h.b16 %v321
        %v569 = vunpack.c.l.b16 %v322
        %v570 = vunpack.c.h.b16 %v322
        %v571 = vunpack.c.l.b16 %v323
        %v572 = vunpack.c.h.b16 %v323
        %v573 = vunpack.c.l.b16 %v324
        %v574 = vunpack.c.h.b16 %v324
        %v575 = vunpack.c.l.b16 %v325
        %v576 = vunpack.c.h.b16 %v325
        %v577 = vunpack.c.l.b16 %v326
        %v578 = vunpack.c.h.b16 %v326
        %v579 = vunpack.c.l.b16 %v327
        %v580 = vunpack.c.h.b16 %v327
        %v581 = vunpack.c.l.b16 %v328
        %v582 = vunpack.c.h.b16 %v328
        %v583 = vunpack.c.l.b16 %v329
        %v584 = vunpack.c.h.b16 %v329
        %v585 = vunpack.c.l.b16 %v330
        %v586 = vunpack.c.h.b16 %v330
        %v587 = vunpack.c.l.b16 %v331
        %v588 = vunpack.c.h.b16 %v331
        %v589 = vunpack.c.l.b16 %v332
        %v590 = vunpack.c.h.b16 %v332
        %v591 = vunpack.c.l.b16 %v333
        %v592 = vunpack.c.h.b16 %v333
        %v593 = vunpack.c.l.b16 %v334
        %v594 = vunpack.c.h.b16 %v334
        %v595 = vunpack.c.l.b16 %v335
        %v596 = vunpack.c.h.b16 %v335
        %v597 = vunpack.c.l.b16 %v336
        %v598 = vunpack.c.h.b16 %v336
        %v599 = vunpack.c.l.b16 %v337
        %v600 = vunpack.c.h.b16 %v337
        %v601 = vunpack.c.l.b16 %v338
        %v602 = vunpack.c.h.b16 %v338
        %v603 = vunpack.c.l.b16 %v339
        %v604 = vunpack.c.h.b16 %v339
        %v605 = vunpack.c.l.b16 %v340
        %v606 = vunpack.c.h.b16 %v340
        %v607 = vunpack.c.l.b16 %v341
        %v608 = vunpack.c.h.b16 %v341
        %v609 = vunpack.c.l.b16 %v342
        %v610 = vunpack.c.h.b16 %v342
        %v611 = vunpack.c.l.b16 %v343
        %v612 = vunpack.c.h.b16 %v343
        %v613 = vunpack.c.l.b16 %v344
        %v614 = vunpack.c.h.b16 %v344
        %v615 = vunpack.c.l.b16 %v345
        %v616 = vunpack.c.h.b16 %v345
        %v617 = vunpack.c.l.b16 %v346
        %v618 = vunpack.c.h.b16 %v346
        %v619 = vunpack.c.l.b16 %v347
        %v620 = vunpack.c.h.b16 %v347
        %v621 = vunpack.c.l.b16 %v348
        %v622 = vunpack.c.h.b16 %v348
        %v623 = vunpack.c.l.b16 %v349
        %v624 = vunpack.c.h.b16 %v349
        %v625 = vunpack.c.l.b16 %v350
        %v626 = vunpack.c.h.b16 %v350
        %v627 = vunpack.c.l.b16 %v351
        %v628 = vunpack.c.h.b16 %v351
        %v629 = vunpack.c.l.b16 %v352
        %v630 = vunpack.c.h.b16 %v352
        %v631 = vunpack.c.l.b16 %v353
        %v632 = vunpack.c.h.b16 %v353
        %v633 = vunpack.c.l.b16 %v354
        %v634 = vunpack.c.h.b16 %v354
        %v635 = vunpack.c.l.b16 %v355
        %v636 = vunpack.c.h.b16 %v355
        %v637 = vunpack.c.l.b16 %v356
        %v638 = vunpack.c.h.b16 %v356
        %v639 = vunpack.c.l.b16 %v357
        %v640 = vunpack.c.h.b16 %v357
        %v641 = vunpack.c.l.b16 %v358
        %v642 = vunpack.c.h.b16 %v358
        %v643 = vunpack.c.l.b16 %v359
        %v644 = vunpack.c.h.b16 %v359
        %v645 = vunpack.c.l.b16 %v360
        %v646 = vunpack.c.h.b16 %v360
        %v647 = vunpack.c.l.b16 %v361
        %v648 = vunpack.c.h.b16 %v361
        %v649 = vunpack.c.l.b16 %v362
        %v650 = vunpack.c.h.b16 %v362
        %v651 = vunpack.c.l.b16 %v363
        %v652 = vunpack.c.h.b16 %v363
        %v653 = vunpack.c.l.b16 %v364
        %v654 = vunpack.c.h.b16 %v364
        %v655 = vunpack.c.l.b16 %v365
        %v656 = vunpack.c.h.b16 %v365
        %v657 = vunpack.c.l.b16 %v366
        %v658 = vunpack.c.h.b16 %v366
        %v659 = vunpack.c.l.b16 %v367
        %v660 = vunpack.c.h.b16 %v367
        %v661 = vunpack.c.l.b16 %v368
        %v662 = vunpack.c.h.b16 %v368
        %v663 = vunpack.c.l.b16 %v369
        %v664 = vunpack.c.h.b16 %v369
        %v665 = vunpack.c.l.b16 %v370
        %v666 = vunpack.c.h.b16 %v370
        %v667 = vunpack.c.l.b16 %v371
        %v668 = vunpack.c.h.b16 %v371
        %v669 = vunpack.c.l.b16 %v372
        %v670 = vunpack.c.h.b16 %v372
        %v671 = vunpack.c.l.b16 %v373
        %v672 = vunpack.c.h.b16 %v373
        %v673 = vunpack.c.l.b16 %v374
        %v674 = vunpack.c.h.b16 %v374
        %v675 = vunpack.c.l.b16 %v375
        %v676 = vunpack.c.h.b16 %v375
        %v677 = vunpack.c.l.b16 %v376
        %v678 = vunpack.c.h.b16 %v376
        %v679 = vunpack.c.l.b16 %v377
        %v680 = vunpack.c.h.b16 %v377
        %v681 = vunpack.c.l.b16 %v378
        %v682 = vunpack.c.h.b16 %v378
        %v683 = vunpack.c.l.b16 %v379
        %v684 = vunpack.c.h.b16 %v379
        %v685 = vunpack.c.l.b16 %v380
        %v686 = vunpack.c.h.b16 %v380
        %v687 = vunpack.c.l.b16 %v381
        %v688 = vunpack.c.h.b16 %v381
        %v689 = vunpack.c.l.b16 %v382
        %v690 = vunpack.c.h.b16 %v382
        %v691 = vunpack.c.l.b16 %v383
        %v692 = vunpack.c.h.b16 %v383
        %v693 = vunpack.c.l.b16 %v384
        %v694 = vunpack.c.h.b16 %v384
        %v695 = vunpack.c.l.b16 %v385
        %v696 = vunpack.c.h.b16 %v385
        %v697 = vunpack.c.l.b16 %v386
        %v698 = vunpack.c.h.b16 %v386
        %v699 = vunpack.c.l.b16 %v387
        %v700 = vunpack.c.h.b16 %v387
        %v701 = vunpack.c.l.b16 %v388
        %v702 = vunpack.c.h.b16 %v388
        %v703 = vunpack.c.l.b16 %v389
        %v704 = vunpack.c.h.b16 %v389
        %v705 = vunpack.c.l.b16 %v390
        %v706 = vunpack.c.h.b16 %v390
        %v707 = vunpack.c.l.b16 %v391
        %v708 = vunpack.c.h.b16 %v391
        %v709 = vunpack.c.l.b16 %v392
        %v710 = vunpack.c.h.b16 %v392
        %v711 = vunpack.c.l.b16 %v393
        %v712 = vunpack.c.h.b16 %v393
        %v713 = vpack.c.b16 %v521, %v505
        %v714 = vpack.c.b16 %v522, %v506
        %v715 = vpack.c.b16 %v523, %v507
        %v716 = vpack.c.b16 %v524, %v508
        %v717 = vpack.c.b16 %v525, %v509
        %v718 = vpack.c.b16 %v526, %v510
        %v719 = vpack.c.b16 %v527, %v511
        %v720 = vpack.c.b16 %v528, %v512
        %v721 = vpack.c.b16 %v529, %v513
        %v722 = vpack.c.b16 %v530, %v514
        %v723 = vpack.c.b16 %v531, %v515
        %v724 = vpack.c.b16 %v532, %v516
        %v725 = vpack.c.b16 %v533, %v517
        %v726 = vpack.c.b16 %v534, %v518
        %v727 = vpack.c.b16 %v535, %v519
        %v728 = vpack.c.b16 %v536, %v520
        %v729 = vpack.c.b16 %v553, %v537
        %v730 = vpack.c.b16 %v554, %v538
        %v731 = vpack.c.b16 %v555, %v539
        %v732 = vpack.c.b16 %v556, %v540
        %v733 = vpack.c.b16 %v557, %v541
        %v734 = vpack.c.b16 %v558, %v542
        %v735 = vpack.c.b16 %v559, %v543
        %v736 = vpack.c.b16 %v560, %v544
        %v737 = vpack.c.b16 %v561, %v545
        %v738 = vpack.c.b16 %v562, %v546
        %v739 = vpack.c.b16 %v563, %v547
        %v740 = vpack.c.b16 %v564, %v548
        %v741 = vpack.c.b16 %v565, %v549
        %v742 = vpack.c.b16 %v566, %v550
        %v743 = vpack.c.b16 %v567, %v551
        %v744 = vpack.c.b16 %v568, %v552
        %v745 = vpack.c.b16 %v585, %v569
        %v746 = vpack.c.b16 %v586, %v570
        %v747 = vpack.c.b16 %v587, %v571
        %v748 = vpack.c.b16 %v588, %v572
        %v749 = vpack.c.b16 %v589, %v573
        %v750 = vpack.c.b16 %v590, %v574
        %v751 = vpack.c.b16 %v591, %v575
        %v752 = vpack.c.b16 %v592, %v576
        %v753 = vpack.c.b16 %v593, %v577
        %v754 = vpack.c.b16 %v594, %v578
        %v755 = vpack.c.b16 %v595, %v579
        %v756 = vpack.c.b16 %v596, %v580
        %v757 = vpack.c.b16 %v597, %v581
        %v758 = vpack.c.b16 %v598, %v582
        %v759 = vpack.c.b16 %v599, %v583
        %v760 = vpack.c.b16 %v600, %v584
        %v761 = vpack.c.b16 %v617, %v601
        %v762 = vpack.c.b16 %v618, %v602
        %v763 = vpack.c.b16 %v619, %v603
        %v764 = vpack.c.b16 %v620, %v604
        %v765 = vpack.c.b16 %v621, %v605
        %v766 = vpack.c.b16 %v622, %v606
        %v767 = vpack.c.b16 %v623, %v607
        %v768 = vpack.c.b16 %v624, %v608
        %v769 = vpack.c.b16 %v625, %v609
        %v770 = vpack.c.b16 %v626, %v610
        %v771 = vpack.c.b16 %v627, %v611
        %v772 = vpack.c.b16 %v628, %v612
        %v773 = vpack.c.b16 %v629, %v613
        %v774 = vpack.c.b16 %v630, %v614
        %v775 = vpack.c.b16 %v631, %v615
        %v776 = vpack.c.b16 %v632, %v616
        %v777 = vpack.c.b16 %v649, %v633
        %v778 = vpack.c.b16 %v650, %v634
        %v779 = vpack.c.b16 %v651, %v635
        %v780 = vpack.c.b16 %v652, %v636
        %v781 = vpack.c.b16 %v653, %v637
        %v782 = vpack.c.b16 %v654, %v638
        %v783 = vpack.c.b16 %v655, %v639
        %v784 = vpack.c.b16 %v656, %v640
        %v785 = vpack.c.b16 %v657, %v641
        %v786 = vpack.c.b16 %v658, %v642
        %v787 = vpack.c.b16 %v659, %v643
        %v788 = vpack.c.b16 %v660, %v644
        %v789 = vpack.c.b16 %v661, %v645
        %v790 = vpack.c.b16 %v662, %v646
        %v791 = vpack.c.b16 %v663, %v647
        %v792 = vpack.c.b16 %v664, %v648
        %v793 = vpack.c.b16 %v681, %v665
        %v794 = vpack.c.b16 %v682, %v666
        %v795 = vpack.c.b16 %v683, %v667
        %v796 = vpack.c.b16 %v684, %v668
        %v797 = vpack.c.b16 %v685, %v669
        %v798 = vpack.c.b16 %v686, %v670
        %v799 = vpack.c.b16 %v687, %v671
        %v800 = vpack.c.b16 %v688, %v672
        %v801 = vpack.c.b16 %v689, %v673
        %v802 = vpack.c.b16 %v690, %v674
        %v803 = vpack.c.b16 %v691, %v675
        %v804 = vpack.c.b16 %v692, %v676
        %v805 = vpack.c.b16 %v693, %v677
        %v806 = vpack.c.b16 %v694, %v678
        %v807 = vpack.c.b16 %v695, %v679
        %v808 = vpack.c.b16 %v696, %v680
        %v809 = vpack.c.b16 %v697, %v697
        %v810 = vpack.c.b16 %v698, %v698
        %v811 = vpack.c.b16 %v699, %v699
        %v812 = vpack.c.b16 %v700, %v700
        %v813 = vpack.c.b16 %v701, %v701
        %v814 = vpack.c.b16 %v702, %v702
        %v815 = vpack.c.b16 %v703, %v703
        %v816 = vpack.c.b16 %v704, %v704
        %v817 = vpack.c.b16 %v705, %v705
        %v818 = vpack.c.b16 %v706, %v706
        %v819 = vpack.c.b16 %v707, %v707
        %v820 = vpack.c.b16 %v708, %v708
        %v821 = vpack.c.b16 %v709, %v709
        %v822 = vpack.c.b16 %v710, %v710
        %v823 = vpack.c.b16 %v711, %v711
        %v824 = vpack.c.b16 %v712, %v712
        %937 = vmatprep.subr.bf16.mxu0 0
        %938 = vmatpush1.bf16.xpose.msra.mxu0 0
        %939 = vmatprep.subr.bf16.mxu0 %v810
        %940 = vmatpush1.bf16.xpose.msra.mxu0 %v809
        %941 = vmatprep.subr.bf16.mxu0 %v794
        %942 = vmatpush1.bf16.xpose.msra.mxu0 %v793
        %943 = vmatprep.subr.bf16.mxu0 %v778
        %944 = vmatpush1.bf16.xpose.msra.mxu0 %v777
        %945 = vmatprep.subr.bf16.mxu0 %v762
        %946 = vmatpush1.bf16.xpose.msra.mxu0 %v761
        %947 = vmatprep.subr.bf16.mxu0 %v746
        %948 = vmatpush1.bf16.xpose.msra.mxu0 %v745
        %949 = vmatprep.subr.bf16.mxu0 %v730
        %950 = vmatpush1.bf16.xpose.msra.mxu0 %v729
        %951 = vmatprep.subr.bf16.mxu0 %v714
        %952 = vmatpush1.bf16.xpose.msra.mxu0 %v713
        %953 = vmatprep.subr.bf16.mxu0 0
        %954 = vmatpush2.bf16.xpose.msra.mxu0 0
        %955 = vmatprep.subr.bf16.mxu0 0
        %956 = vmatpush2.bf16.xpose.msra.mxu0 0
        %957 = vmatprep.subr.bf16.mxu0 0
        %958 = vmatpush2.bf16.xpose.msra.mxu0 0
        %959 = vmatprep.subr.bf16.mxu0 0
        %960 = vmatpush2.bf16.xpose.msra.mxu0 0
        %961 = vmatprep.subr.bf16.mxu0 0
        %962 = vmatpush2.bf16.xpose.msra.mxu0 0
        %963 = vmatprep.subr.bf16.mxu0 0
        %964 = vmatpush2.bf16.xpose.msra.mxu0 0
        %965 = vmatprep.subr.bf16.mxu0 0
        %966 = vmatpush2.bf16.xpose.msra.mxu0 0
        %967 = vmatprep.subr.bf16.mxu0 0
        %968 = vmatpush2.bf16.xpose.msra.mxu0 0
        %969 = vmatprep.mubr.bf16.mxu0 %v275
        %970 = vmatmul.mubr.bf16.gmra.mxu0 %v274
        %v971 = vpop.f32.mrf.mxu0
        %v972 = vadd.f32 %v399, %v971
        %v973 = vpop.f32.mrf.mxu0
        %v974 = vpop.f32.mrf.mxu0
        %v975 = vpop.f32.mrf.mxu0
        %976 = vdwg.mxu0
        %977 = vmatprep.subr.bf16.mxu0 0
        %978 = vmatpush1.bf16.xpose.msra.mxu0 0
        %979 = vmatprep.subr.bf16.mxu0 %v812
        %980 = vmatpush1.bf16.xpose.msra.mxu0 %v811
        %981 = vmatprep.subr.bf16.mxu0 %v796
        %982 = vmatpush1.bf16.xpose.msra.mxu0 %v795
        %983 = vmatprep.subr.bf16.mxu0 %v780
        %984 = vmatpush1.bf16.xpose.msra.mxu0 %v779
        %985 = vmatprep.subr.bf16.mxu0 %v764
        %986 = vmatpush1.bf16.xpose.msra.mxu0 %v763
        %987 = vmatprep.subr.bf16.mxu0 %v748
        %988 = vmatpush1.bf16.xpose.msra.mxu0 %v747
        %989 = vmatprep.subr.bf16.mxu0 %v732
        %990 = vmatpush1.bf16.xpose.msra.mxu0 %v731
        %991 = vmatprep.subr.bf16.mxu0 %v716
        %992 = vmatpush1.bf16.xpose.msra.mxu0 %v715
        %993 = vmatprep.subr.bf16.mxu0 0
        %994 = vmatpush2.bf16.xpose.msra.mxu0 0
        %995 = vmatprep.subr.bf16.mxu0 0
        %996 = vmatpush2.bf16.xpose.msra.mxu0 0
        %997 = vmatprep.subr.bf16.mxu0 0
        %998 = vmatpush2.bf16.xpose.msra.mxu0 0
        %999 = vmatprep.subr.bf16.mxu0 0
        %1000 = vmatpush2.bf16.xpose.msra.mxu0 0
        %1001 = vmatprep.subr.bf16.mxu0 0
        %1002 = vmatpush2.bf16.xpose.msra.mxu0 0
        %1003 = vmatprep.subr.bf16.mxu0 0
        %1004 = vmatpush2.bf16.xpose.msra.mxu0 0
        %1005 = vmatprep.subr.bf16.mxu0 0
        %1006 = vmatpush2.bf16.xpose.msra.mxu0 0
        %1007 = vmatprep.subr.bf16.mxu0 0
        %1008 = vmatpush2.bf16.xpose.msra.mxu0 0
        %1009 = vmatprep.mubr.bf16.mxu0 %v277
        %1010 = vmatmul.mubr.bf16.gmra.mxu0 %v276
        %v1011 = vpop.f32.mrf.mxu0
        %v1012 = vadd.f32 %v972, %v1011
        %v1013 = vpop.f32.mrf.mxu0
        %v1014 = vpop.f32.mrf.mxu0
        %v1015 = vpop.f32.mrf.mxu0
        %1016 = vdwg.mxu0
        %1017 = vmatprep.subr.bf16.mxu0 0
        %1018 = vmatpush1.bf16.xpose.msra.mxu0 0
        %1019 = vmatprep.subr.bf16.mxu0 %v814
        %1020 = vmatpush1.bf16.xpose.msra.mxu0 %v813
        %1021 = vmatprep.subr.bf16.mxu0 %v798
        %1022 = vmatpush1.bf16.xpose.msra.mxu0 %v797
        %1023 = vmatprep.subr.bf16.mxu0 %v782
        %1024 = vmatpush1.bf16.xpose.msra.mxu0 %v781
        %1025 = vmatprep.subr.bf16.mxu0 %v766
        %1026 = vmatpush1.bf16.xpose.msra.mxu0 %v765
        %1027 = vmatprep.subr.bf16.mxu0 %v750
        %1028 = vmatpush1.bf16.xpose.msra.mxu0 %v749
        %1029 = vmatprep.subr.bf16.mxu0 %v734
        %1030 = vmatpush1.bf16.xpose.msra.mxu0 %v733
        %1031 = vmatprep.subr.bf16.mxu0 %v718
        %1032 = vmatpush1.bf16.xpose.msra.mxu0 %v717
        %1033 = vmatprep.subr.bf16.mxu0 0
        %1034 = vmatpush2.bf16.xpose.msra.mxu0 0
        %1035 = vmatprep.subr.bf16.mxu0 0
        %1036 = vmatpush2.bf16.xpose.msra.mxu0 0
        %1037 = vmatprep.subr.bf16.mxu0 0
        %1038 = vmatpush2.bf16.xpose.msra.mxu0 0
        %1039 = vmatprep.subr.bf16.mxu0 0
        %1040 = vmatpush2.bf16.xpose.msra.mxu0 0
        %1041 = vmatprep.subr.bf16.mxu0 0
        %1042 = vmatpush2.bf16.xpose.msra.mxu0 0
        %1043 = vmatprep.subr.bf16.mxu0 0
        %1044 = vmatpush2.bf16.xpose.msra.mxu0 0
        %1045 = vmatprep.subr.bf16.mxu0 0
        %1046 = vmatpush2.bf16.xpose.msra.mxu0 0
        %1047 = vmatprep.subr.bf16.mxu0 0
        %1048 = vmatpush2.bf16.xpose.msra.mxu0 0
        %1049 = vmatprep.mubr.bf16.mxu0 %v279
        %1050 = vmatmul.mubr.bf16.gmra.mxu0 %v278
        %v1051 = vpop.f32.mrf.mxu0
        %v1052 = vadd.f32 %v1012, %v1051
        %v1053 = vpop.f32.mrf.mxu0
        %v1054 = vpop.f32.mrf.mxu0
        %v1055 = vpop.f32.mrf.mxu0
        %1056 = vdwg.mxu0
        %1057 = vmatprep.subr.bf16.mxu0 0
        %1058 = vmatpush1.bf16.xpose.msra.mxu0 0
        %1059 = vmatprep.subr.bf16.mxu0 %v816
        %1060 = vmatpush1.bf16.xpose.msra.mxu0 %v815
        %1061 = vmatprep.subr.bf16.mxu0 %v800
        %1062 = vmatpush1.bf16.xpose.msra.mxu0 %v799
        %1063 = vmatprep.subr.bf16.mxu0 %v784
        %1064 = vmatpush1.bf16.xpose.msra.mxu0 %v783
        %1065 = vmatprep.subr.bf16.mxu0 %v768
        %1066 = vmatpush1.bf16.xpose.msra.mxu0 %v767
        %1067 = vmatprep.subr.bf16.mxu0 %v752
        %1068 = vmatpush1.bf16.xpose.msra.mxu0 %v751
        %1069 = vmatprep.subr.bf16.mxu0 %v736
        %1070 = vmatpush1.bf16.xpose.msra.mxu0 %v735
        %1071 = vmatprep.subr.bf16.mxu0 %v720
        %1072 = vmatpush1.bf16.xpose.msra.mxu0 %v719
        %1073 = vmatprep.subr.bf16.mxu0 0
        %1074 = vmatpush2.bf16.xpose.msra.mxu0 0
        %1075 = vmatprep.subr.bf16.mxu0 0
        %1076 = vmatpush2.bf16.xpose.msra.mxu0 0
        %1077 = vmatprep.subr.bf16.mxu0 0
        %1078 = vmatpush2.bf16.xpose.msra.mxu0 0
        %1079 = vmatprep.subr.bf16.mxu0 0
        %1080 = vmatpush2.bf16.xpose.msra.mxu0 0
        %1081 = vmatprep.subr.bf16.mxu0 0
        %1082 = vmatpush2.bf16.xpose.msra.mxu0 0
        %1083 = vmatprep.subr.bf16.mxu0 0
        %1084 = vmatpush2.bf16.xpose.msra.mxu0 0
        %1085 = vmatprep.subr.bf16.mxu0 0
        %1086 = vmatpush2.bf16.xpose.msra.mxu0 0
        %1087 = vmatprep.subr.bf16.mxu0 0
        %1088 = vmatpush2.bf16.xpose.msra.mxu0 0
        %1089 = vmatprep.mubr.bf16.mxu0 %v281
        %1090 = vmatmul.mubr.bf16.gmra.mxu0 %v280
        %v1091 = vpop.f32.mrf.mxu0
        %v1092 = vadd.f32 %v1052, %v1091
        %v1093 = vpop.f32.mrf.mxu0
        %v1094 = vpop.f32.mrf.mxu0
        %v1095 = vpop.f32.mrf.mxu0
        %1096 = vdwg.mxu0
        %1097 = vmatprep.subr.bf16.mxu0 0
        %1098 = vmatpush1.bf16.xpose.msra.mxu0 0
        %1099 = vmatprep.subr.bf16.mxu0 %v818
        %1100 = vmatpush1.bf16.xpose.msra.mxu0 %v817
        %1101 = vmatprep.subr.bf16.mxu0 %v802
        %1102 = vmatpush1.bf16.xpose.msra.mxu0 %v801
        %1103 = vmatprep.subr.bf16.mxu0 %v786
        %1104 = vmatpush1.bf16.xpose.msra.mxu0 %v785
        %1105 = vmatprep.subr.bf16.mxu0 %v770
        %1106 = vmatpush1.bf16.xpose.msra.mxu0 %v769
        %1107 = vmatprep.subr.bf16.mxu0 %v754
        %1108 = vmatpush1.bf16.xpose.msra.mxu0 %v753
        %1109 = vmatprep.subr.bf16.mxu0 %v738
        %1110 = vmatpush1.bf16.xpose.msra.mxu0 %v737
        %1111 = vmatprep.subr.bf16.mxu0 %v722
        %1112 = vmatpush1.bf16.xpose.msra.mxu0 %v721
        %1113 = vmatprep.subr.bf16.mxu0 0
        %1114 = vmatpush2.bf16.xpose.msra.mxu0 0
        %1115 = vmatprep.subr.bf16.mxu0 0
        %1116 = vmatpush2.bf16.xpose.msra.mxu0 0
        %1117 = vmatprep.subr.bf16.mxu0 0
        %1118 = vmatpush2.bf16.xpose.msra.mxu0 0
        %1119 = vmatprep.subr.bf16.mxu0 0
        %1120 = vmatpush2.bf16.xpose.msra.mxu0 0
        %1121 = vmatprep.subr.bf16.mxu0 0
        %1122 = vmatpush2.bf16.xpose.msra.mxu0 0
        %1123 = vmatprep.subr.bf16.mxu0 0
        %1124 = vmatpush2.bf16.xpose.msra.mxu0 0
        %1125 = vmatprep.subr.bf16.mxu0 0
        %1126 = vmatpush2.bf16.xpose.msra.mxu0 0
        %1127 = vmatprep.subr.bf16.mxu0 0
        %1128 = vmatpush2.bf16.xpose.msra.mxu0 0
        %1129 = vmatprep.mubr.bf16.mxu0 %v283
        %1130 = vmatmul.mubr.bf16.gmra.mxu0 %v282
        %v1131 = vpop.f32.mrf.mxu0
        %v1132 = vadd.f32 %v1092, %v1131
        %v1133 = vpop.f32.mrf.mxu0
        %v1134 = vpop.f32.mrf.mxu0
        %v1135 = vpop.f32.mrf.mxu0
        %1136 = vdwg.mxu0
        %1137 = vmatprep.subr.bf16.mxu0 0
        %1138 = vmatpush1.bf16.xpose.msra.mxu0 0
        %1139 = vmatprep.subr.bf16.mxu0 %v820
        %1140 = vmatpush1.bf16.xpose.msra.mxu0 %v819
        %1141 = vmatprep.subr.bf16.mxu0 %v804
        %1142 = vmatpush1.bf16.xpose.msra.mxu0 %v803
        %1143 = vmatprep.subr.bf16.mxu0 %v788
        %1144 = vmatpush1.bf16.xpose.msra.mxu0 %v787
        %1145 = vmatprep.subr.bf16.mxu0 %v772
        %1146 = vmatpush1.bf16.xpose.msra.mxu0 %v771
        %1147 = vmatprep.subr.bf16.mxu0 %v756
        %1148 = vmatpush1.bf16.xpose.msra.mxu0 %v755
        %1149 = vmatprep.subr.bf16.mxu0 %v740
        %1150 = vmatpush1.bf16.xpose.msra.mxu0 %v739
        %1151 = vmatprep.subr.bf16.mxu0 %v724
        %1152 = vmatpush1.bf16.xpose.msra.mxu0 %v723
        %1153 = vmatprep.subr.bf16.mxu0 0
        %1154 = vmatpush2.bf16.xpose.msra.mxu0 0
        %1155 = vmatprep.subr.bf16.mxu0 0
        %1156 = vmatpush2.bf16.xpose.msra.mxu0 0
        %1157 = vmatprep.subr.bf16.mxu0 0
        %1158 = vmatpush2.bf16.xpose.msra.mxu0 0
        %1159 = vmatprep.subr.bf16.mxu0 0
        %1160 = vmatpush2.bf16.xpose.msra.mxu0 0
        %1161 = vmatprep.subr.bf16.mxu0 0
        %1162 = vmatpush2.bf16.xpose.msra.mxu0 0
        %1163 = vmatprep.subr.bf16.mxu0 0
        %1164 = vmatpush2.bf16.xpose.msra.mxu0 0
        %1165 = vmatprep.subr.bf16.mxu0 0
        %1166 = vmatpush2.bf16.xpose.msra.mxu0 0
        %1167 = vmatprep.subr.bf16.mxu0 0
        %1168 = vmatpush2.bf16.xpose.msra.mxu0 0
        %1169 = vmatprep.mubr.bf16.mxu0 %v285
        %1170 = vmatmul.mubr.bf16.gmra.mxu0 %v284
        %v1171 = vpop.f32.mrf.mxu0
        %v1172 = vadd.f32 %v1132, %v1171
        %v1173 = vpop.f32.mrf.mxu0
        %v1174 = vpop.f32.mrf.mxu0
        %v1175 = vpop.f32.mrf.mxu0
        %1176 = vdwg.mxu0
        %1177 = vmatprep.subr.bf16.mxu0 0
        %1178 = vmatpush1.bf16.xpose.msra.mxu0 0
        %1179 = vmatprep.subr.bf16.mxu0 %v822
        %1180 = vmatpush1.bf16.xpose.msra.mxu0 %v821
        %1181 = vmatprep.subr.bf16.mxu0 %v806
        %1182 = vmatpush1.bf16.xpose.msra.mxu0 %v805
        %1183 = vmatprep.subr.bf16.mxu0 %v790
        %1184 = vmatpush1.bf16.xpose.msra.mxu0 %v789
        %1185 = vmatprep.subr.bf16.mxu0 %v774
        %1186 = vmatpush1.bf16.xpose.msra.mxu0 %v773
        %1187 = vmatprep.subr.bf16.mxu0 %v758
        %1188 = vmatpush1.bf16.xpose.msra.mxu0 %v757
        %1189 = vmatprep.subr.bf16.mxu0 %v742
        %1190 = vmatpush1.bf16.xpose.msra.mxu0 %v741
        %1191 = vmatprep.subr.bf16.mxu0 %v726
        %1192 = vmatpush1.bf16.xpose.msra.mxu0 %v725
        %1193 = vmatprep.subr.bf16.mxu0 0
        %1194 = vmatpush2.bf16.xpose.msra.mxu0 0
        %1195 = vmatprep.subr.bf16.mxu0 0
        %1196 = vmatpush2.bf16.xpose.msra.mxu0 0
        %1197 = vmatprep.subr.bf16.mxu0 0
        %1198 = vmatpush2.bf16.xpose.msra.mxu0 0
        %1199 = vmatprep.subr.bf16.mxu0 0
        %1200 = vmatpush2.bf16.xpose.msra.mxu0 0
        %1201 = vmatprep.subr.bf16.mxu0 0
        %1202 = vmatpush2.bf16.xpose.msra.mxu0 0
        %1203 = vmatprep.subr.bf16.mxu0 0
        %1204 = vmatpush2.bf16.xpose.msra.mxu0 0
        %1205 = vmatprep.subr.bf16.mxu0 0
        %1206 = vmatpush2.bf16.xpose.msra.mxu0 0
        %1207 = vmatprep.subr.bf16.mxu0 0
        %1208 = vmatpush2.bf16.xpose.msra.mxu0 0
        %1209 = vmatprep.mubr.bf16.mxu0 %v287
        %1210 = vmatmul.mubr.bf16.gmra.mxu0 %v286
        %v1211 = vpop.f32.mrf.mxu0
        %v1212 = vadd.f32 %v1172, %v1211
        %v1213 = vpop.f32.mrf.mxu0
        %v1214 = vpop.f32.mrf.mxu0
        %v1215 = vpop.f32.mrf.mxu0
        %1216 = vdwg.mxu0
        %1217 = vmatprep.subr.bf16.mxu0 0
        %1218 = vmatpush1.bf16.xpose.msra.mxu0 0
        %1219 = vmatprep.subr.bf16.mxu0 %v824
        %1220 = vmatpush1.bf16.xpose.msra.mxu0 %v823
        %1221 = vmatprep.subr.bf16.mxu0 %v808
        %1222 = vmatpush1.bf16.xpose.msra.mxu0 %v807
        %1223 = vmatprep.subr.bf16.mxu0 %v792
        %1224 = vmatpush1.bf16.xpose.msra.mxu0 %v791
        %1225 = vmatprep.subr.bf16.mxu0 %v776
        %1226 = vmatpush1.bf16.xpose.msra.mxu0 %v775
        %1227 = vmatprep.subr.bf16.mxu0 %v760
        %1228 = vmatpush1.bf16.xpose.msra.mxu0 %v759
        %1229 = vmatprep.subr.bf16.mxu0 %v744
        %1230 = vmatpush1.bf16.xpose.msra.mxu0 %v743
        %1231 = vmatprep.subr.bf16.mxu0 %v728
        %1232 = vmatpush1.bf16.xpose.msra.mxu0 %v727
        %1233 = vmatprep.subr.bf16.mxu0 0
        %1234 = vmatpush2.bf16.xpose.msra.mxu0 0
        %1235 = vmatprep.subr.bf16.mxu0 0
        %1236 = vmatpush2.bf16.xpose.msra.mxu0 0
        %1237 = vmatprep.subr.bf16.mxu0 0
        %1238 = vmatpush2.bf16.xpose.msra.mxu0 0
        %1239 = vmatprep.subr.bf16.mxu0 0
        %1240 = vmatpush2.bf16.xpose.msra.mxu0 0
        %1241 = vmatprep.subr.bf16.mxu0 0
        %1242 = vmatpush2.bf16.xpose.msra.mxu0 0
        %1243 = vmatprep.subr.bf16.mxu0 0
        %1244 = vmatpush2.bf16.xpose.msra.mxu0 0
        %1245 = vmatprep.subr.bf16.mxu0 0
        %1246 = vmatpush2.bf16.xpose.msra.mxu0 0
        %1247 = vmatprep.subr.bf16.mxu0 0
        %1248 = vmatpush2.bf16.xpose.msra.mxu0 0
        %1249 = vmatprep.mubr.bf16.mxu0 %v289
        %1250 = vmatmul.mubr.bf16.gmra.mxu0 %v288
        %v1251 = vpop.f32.mrf.mxu0
        %v1252 = vadd.f32 %v1212, %v1251
        %v1253 = vpop.f32.mrf.mxu0
        %v1254 = vpop.f32.mrf.mxu0
        %v1255 = vpop.f32.mrf.mxu0
        %1256 = vdwg.mxu0
        %v1257 = vmax.f32 %v1252, 0.0
        %v1258 = vld [vmem:[%s3] sm:$0x1]
        %v1260 = vlaneseq
        %v1261 = vshrl.u32 %v1260, 7
        %v1262 = vsub.s32 0, %v1261
        %v1263 = vrot.slane %v1258, %v1262
        %v1265 = vmul.f32 %v1257, %v1263
        %vm1266 = vcmask 818176
        %v1267 = vsel %vm1266, %v1265, 0.0
        %1268 = vadd.xlane.f32.xlu0 %v1267
        %v1269 = vpop.xlane.xlu0 %1268
        %s1270 = sld [smem:[#allocation2]]
        %v1271 = vstv %s1270
        %v1272 = vadd.f32 %v1269, %v1271
        %v1273 = vrot.slane %v1272, 4
        %v1274 = vmax.f32 %v1272, %v1273
        %v1275 = vrot.slane %v1274, 2
        %v1276 = vmax.f32 %v1274, %v1275
        %v1277 = vrot.slane %v1276, 1
        %v1278 = vmax.f32 %v1276, %v1277
        %v1279 = vsub.f32 %v1272, %v1278
        %v1280 = vmul.f32 %v1279, 1.442695
        %v1281 = vpow.pop %v1280
        %v1282 = vrot.slane %v1281, 4
        %v1283 = vadd.f32 %v1281, %v1282
        %v1284 = vrot.slane %v1283, 2
        %v1285 = vadd.f32 %v1283, %v1284
        %v1286 = vrot.slane %v1285, 1
        %v1287 = vadd.f32 %v1285, %v1286
        %v1288 = vlog2.pop %v1287
        %v1289 = vmul.f32 %v1288, 0.6931472
        %v1290 = vsub.f32 %v1279, %v1289
        %vm1291 = vcmask 7168
        %1292 = vst.msk [vmem:[%s256] sm:$0xff] %vm1291, %v1272
        %vm1293 = vcmask 15368
        %1294 = vst.msk [vmem:[%s256] sm:$0xff] %vm1293, %v1290
        %p1295 = scmp.lt.s32.totalorder %s21, 1
        %s1296 = scalar_select %p1295, %s21, 1
        %s1297 = smul.addr %s1296, 8
        %s1298 = scalar_lea.vmem %s5, %s1297
        // Predicated region
        $region49: #{tpu_custom_call.1} parent=39 // pred_check
          %p1299 = pneg %p149
        $region50: #{tpu_custom_call.1} parent=39 // pred_check_branch
          %1301 = sbr.rel (%p1299) target = $region52
        $region51: #{tpu_custom_call.1} parent=39 // pred_region
          _
        $region52: #{tpu_custom_call.1} parent=39 // pred_fallthru
          _
      $region40: #{tpu_custom_call.1} parent=5 // pred_fallthru
        _
      %p1302 = scmp.le.s32.totalorder 2, %s16
      // Predicated region
      $region53: #{tpu_custom_call.1} parent=5 // pred_check
        %p1303 = pneg %p1302
      $region54: #{tpu_custom_call.1} parent=5 // pred_check_branch
        %1305 = sbr.rel (%p1303) target = $region56
      $region55: #{tpu_custom_call.1} parent=5 // pred_region
        %s1306 = ssub.s32 %s16, 2
        // Predicated region
        $region57: #{tpu_custom_call.1} parent=55 // pred_check
          %p1307 = pneg %p155
        $region58: #{tpu_custom_call.1} parent=55 // pred_check_branch
          %1309 = sbr.rel (%p1307) target = $region60
        $region59: #{tpu_custom_call.1} parent=55 // pred_region
          %p1310 = scmp.lt.s32.totalorder %s22, 1
          %s1311 = scalar_select %p1310, %s22, 1
          %s1312 = smul.addr %s1311, 8
          %s1313 = scalar_lea.vmem %s5, %s1312
        $region60: #{tpu_custom_call.1} parent=55 // pred_fallthru
          _
      $region56: #{tpu_custom_call.1} parent=5 // pred_fallthru
        _
    $region6: #{tpu_custom_call.1} parent=1 // loop_footer
      %s20 = sadd.s32 1, %s16
    $region7: #{tpu_custom_call.1} parent=1 // loop_footer_branch
      %15 = sbr.rel target = $region3
    $region8: #{tpu_custom_call.1} parent=1 // loop_exit
      _
    %1314 = vsyncpa [#allocation4], 1
    %s1315 = scalar_lea.sflag [#allocation4], 1
    %1316 = vsyncpa %s1315, 1
    %1317 = vsyncpa [#allocation6], 1

</llo_original>
